<compile_context>
chip_gen: v5e
topology: v5e:2x2
jax: 0.10.0
libtpu: 0.0.40
codegen_flags: <defaults>
</compile_context>

<pallas_src>
import math
import jax
import jax.numpy as jnp
from jax import lax
from jax.experimental import pallas as pl
from jax.experimental.pallas import tpu as pltpu


def make_mha_kernel(num_heads: int, head_dim: int, model_dim: int,
                    seq_len: int, seq_tile: int):
    D = model_dim
    S = seq_len
    TS = seq_tile

    def mha_kernel(x_ref, w_hbm_ref, b_ref, o_ref, w_vmem, kqv_ref, heads_ref):
        t = pl.program_id(1)
        b_all = b_ref[...]                       # (1, 4D) f32  [bk*scale|bq|bv|bo]

        # Once per batch (tile axis iterates innermost, marked 'arbitrary'):
        #  * copy fused weights HBM -> VMEM (single copy, no double buffer)
        #  * project the full sequence:  kqv = x @ [Wk/sqrt(dh) | Wq | Wv] + bias
        #    and cache it (bf16) so later row tiles reuse it.
        @pl.when(t == 0)
        def _():
            pltpu.sync_copy(w_hbm_ref, w_vmem)
            x_full = x_ref[0]                                        # (S, D) bf16
            kqv = jnp.dot(x_full, w_vmem[:, :3 * D],
                          preferred_element_type=jnp.float32)        # (S, 3D) f32
            kqv = kqv + b_all[:, :3 * D]
            kqv_ref[...] = kqv.astype(jnp.bfloat16)

        row0 = pl.multiple_of(t * TS, TS)

        # Per-head attention; scores = K @ Q^T, softmax over the query axis,
        # exactly as in the PyTorch reference.  Head outputs are staged into a
        # (TS, D) bf16 buffer so the output projection is ONE dense matmul.
        for h in range(num_heads):               # static unroll (small H)
            lo = h * head_dim
            kh = kqv_ref[pl.ds(row0, TS), pl.ds(lo, head_dim)]        # (TS, dh) pre-scaled
            qh = kqv_ref[:, pl.ds(D + lo, head_dim)]                  # (S,  dh)
            vh = kqv_ref[:, pl.ds(2 * D + lo, head_dim)]              # (S,  dh)

            # scores = K @ Q^T : contract last dims, no transpose materialized.
            s = lax.dot_general(kh, qh, (((1,), (1,)), ((), ())),
                                preferred_element_type=jnp.float32)   # (TS, S)

            # numerically-stable softmax over the query axis (f32)
            s = s - jnp.max(s, axis=-1, keepdims=True)
            p = jnp.exp(s)
            p = p * pl.reciprocal(jnp.sum(p, axis=-1, keepdims=True), approx=True)

            ah = jnp.dot(p.astype(jnp.bfloat16), vh,
                         preferred_element_type=jnp.float32)          # (TS, dh)
            heads_ref[:, lo:lo + head_dim] = ah.astype(jnp.bfloat16)

        # Fused output projection: concat(heads) @ Wo, single D-wide contraction.
        out = jnp.dot(heads_ref[...], w_vmem[:, 3 * D:],
                      preferred_element_type=jnp.float32) + b_all[:, 3 * D:]
        o_ref[0] = out.astype(o_ref.dtype)

    return mha_kernel


def _physical_vmem_bytes():
    try:
        return int(pltpu.get_tpu_info().vmem_capacity_bytes)
    except Exception:
        return None


def _choose_seq_tile(S: int, max_ts: int) -> int:
    """Largest multiple-of-8 divisor of S that is <= max_ts, else full S."""
    if S <= max_ts:
        return S
    for t in range(max_ts, 7, -8):
        if S % t == 0:
            return t
    # TODO(synk): pad or stream awkward sequence lengths instead of full-S rows.
    return S


def multi_head_attention(x, params, num_heads):
    """x: (B, S, D) float32. params: weights stored (in, out), biases (1, out)."""
    B, S, D = x.shape
    assert D % num_heads == 0
    head_dim = D // num_heads
    scale = 1.0 / math.sqrt(head_dim)

    phys_vmem = _physical_vmem_bytes()
    if phys_vmem is None:
        vmem_limit = 48 * 1024 * 1024            # safe on every generation
        max_ts = 256
    else:
        # ~85% of physical VMEM, leaving compiler-scratch headroom:
        # v5e/v6e (128 MiB) -> ~108 MiB, TS up to 512; v7x (64 MiB) -> ~54 MiB, TS up to 256.
        vmem_limit = min(int(phys_vmem * 0.85), 112 * 1024 * 1024)
        max_ts = 512 if phys_vmem >= 100 * 1024 * 1024 else 256
    TS = _choose_seq_tile(S, max_ts)
    num_tiles = S // TS

    # bf16 matmul operands (MXU-native); biases stay f32.
    x_bf = x.astype(jnp.bfloat16)
    # Fused weights [Wk/sqrt(dh) | Wq | Wv | Wo]; scale folded into Wk/bk in f32.
    w_cat = jnp.concatenate(
        [params["wk"] * scale, params["wq"], params["wv"], params["wo"]],
        axis=1).astype(jnp.bfloat16)                                     # (D, 4D)
    b_cat = jnp.concatenate(
        [params["bk"] * scale, params["bq"], params["bv"], params["bo"]],
        axis=1)                                                          # (1, 4D) f32

    kernel = make_mha_kernel(num_heads, head_dim, D, S, TS)

    cost = pl.CostEstimate(
        flops=8 * B * S * D * D + 4 * B * S * S * D,       # projections + attention
        transcendentals=B * num_heads * S * S,             # softmax exp
        bytes_accessed=B * S * D * 2 + 4 * D * D * 2 + 4 * D * 4 + B * S * D * 4,
    )

    return pl.pallas_call(
        kernel,
        out_shape=jax.ShapeDtypeStruct((B, S, D), x.dtype),
        grid_spec=pltpu.PrefetchScalarGridSpec(
            num_scalar_prefetch=0,
            grid=(B, num_tiles),
            in_specs=[
                pl.BlockSpec((1, S, D), lambda b, t: (b, 0, 0)),   # x (full sequence)
                pl.BlockSpec(memory_space=pl.ANY),                 # fused weights, stay in HBM
                pl.BlockSpec((1, 4 * D), lambda b, t: (0, 0)),     # fused biases
            ],
            out_specs=pl.BlockSpec((1, TS, D), lambda b, t: (b, t, 0)),
            scratch_shapes=[
                pltpu.VMEM((D, 4 * D), jnp.bfloat16),   # single VMEM copy of weights
                pltpu.VMEM((S, 3 * D), jnp.bfloat16),   # cached K(scaled)/Q/V projection
                pltpu.VMEM((TS, D), jnp.bfloat16),      # per-head output staging
            ],
        ),
        compiler_params=pltpu.CompilerParams(
            # batch stays 'parallel' (v7x megacore); the tile axis must be
            # 'arbitrary' because the projection cache carries state across tiles.
            dimension_semantics=("parallel", "arbitrary"),
            vmem_limit_bytes=vmem_limit,
        ),
        cost_estimate=cost,
    )(x_bf, w_cat, b_cat)


def reference_mha(x, params, num_heads):
    """Pure-JAX f32 reference mirroring the PyTorch forward (mask=None, eval)."""
    B, S, D = x.shape
    dh = D // num_heads

    def proj(w, b):
        return x @ w + b  # (B, S, D)

    def split(t):  # (B, S, D) -> (B, H, S, dh)
        return t.reshape(B, S, num_heads, dh).transpose(0, 2, 1, 3)

    k = split(proj(params["wk"], params["bk"]))
    q = split(proj(params["wq"], params["bq"]))
    v = split(proj(params["wv"], params["bv"]))

    scores = jnp.einsum("bhsd,bhtd->bhst", k, q) / math.sqrt(dh)
    scores = jax.nn.softmax(scores, axis=-1)
    out = jnp.einsum("bhst,bhtd->bhsd", scores, v)
    out = out.transpose(0, 2, 1, 3).reshape(B, S, D)
    return out @ params["wo"] + params["bo"]


def init_params(key, model_dim):
    """Deterministic parameter init (uniform, PyTorch-Linear-like bound)."""
    bound = 1.0 / math.sqrt(model_dim)
    keys = jax.random.split(key, 8)
    names = ["wk", "bk", "wq", "bq", "wv", "bv", "wo", "bo"]
    params = {}
    for i, name in enumerate(names):
        if name.startswith("w"):
            shape = (model_dim, model_dim)   # stored as (in, out)
        else:
            shape = (1, model_dim)
        params[name] = jax.random.uniform(
            keys[i], shape, jnp.float32, minval=-bound, maxval=bound)
    return params


if __name__ == "__main__":
    # small shapes consistent with the module's forward
    batch, seq_len, model_dim, num_heads = 2, 8, 32, 4

    key = jax.random.PRNGKey(0)
    kx, kp = jax.random.split(key)
    x = jax.random.normal(kx, (batch, seq_len, model_dim), jnp.float32)
    params = init_params(kp, model_dim)

    out = multi_head_attention(x, params, num_heads)
    out = jax.block_until_ready(out)

    ref = reference_mha(x, params, num_heads)
    assert out.shape == (batch, seq_len, model_dim)
    # bf16 matmuls + approx reciprocal -> loosened tolerance vs the f32 reference
    assert jnp.allclose(out, ref, atol=5e-2, rtol=5e-2), "mismatch vs JAX reference"

    print("KERNEL_OK")
</pallas_src>

<mosaic_0001>
module attributes {stable_mosaic.version = 11 : i64} {
  func.func @mha_kernel(%arg0: i32, %arg1: i32, %arg2: memref<1x8x32xbf16, #tpu.memory_space<vmem>>, %arg3: memref<32x128xbf16, #tpu.memory_space<any>>, %arg4: memref<1x128xf32, #tpu.memory_space<vmem>>, %arg5: memref<1x8x32xf32, #tpu.memory_space<vmem>>, %arg6: memref<32x128xbf16, #tpu.memory_space<vmem>>, %arg7: memref<8x96xbf16, #tpu.memory_space<vmem>>, %arg8: memref<8x32xbf16, #tpu.memory_space<vmem>>) attributes {dimension_semantics = [#tpu.dimension_semantics<parallel>, #tpu.dimension_semantics<arbitrary>], iteration_bounds = array<i64: 2, 1>, scalar_prefetch = 0 : i64, scratch_operands = 3 : i64, tpu.core_type = #tpu.core_type<tc>, window_params = [{transform_indices = @transform_0, window_bounds = array<i64: 1, 8, 32>}, {}, {pipeline_mode = #tpu.pipeline_mode<synchronous>, transform_indices = @transform_2, window_bounds = array<i64: 1, 128>}, {transform_indices = @transform_3, window_bounds = array<i64: 1, 8, 32>}]} {
    %c0 = arith.constant 0 : index
    %c0_0 = arith.constant 0 : index
    %0 = vector.load %arg4[%c0, %c0_0] : memref<1x128xf32, #tpu.memory_space<vmem>>, vector<1x128xf32>
    %c0_i32 = arith.constant 0 : i32
    %1 = arith.cmpi eq, %arg1, %c0_i32 : i32
    %2 = arith.extui %1 : i1 to i32
    %c0_i32_1 = arith.constant 0 : i32
    %3 = arith.cmpi ne, %2, %c0_i32_1 : i32
    scf.if %3 {
      "tpu.region"() ({
        %100 = tpu.sem_alloc : memref<!tpu.dma_semaphore, #tpu.memory_space<semaphore_mem>>
        tpu.enqueue_dma source(%arg3 : memref<32x128xbf16, #tpu.memory_space<any>>) target(%arg6 : memref<32x128xbf16, #tpu.memory_space<vmem>>) target_semaphore(%100 : memref<!tpu.dma_semaphore, #tpu.memory_space<semaphore_mem>>)
        tpu.wait_dma2 semaphore(%100 : memref<!tpu.dma_semaphore, #tpu.memory_space<semaphore_mem>>) src(%arg3 : memref<32x128xbf16, #tpu.memory_space<any>>) dst(%arg6 : memref<32x128xbf16, #tpu.memory_space<vmem>>)
        tpu.yield
      }) : () -> ()
      %c0_41 = arith.constant 0 : index
      %c0_42 = arith.constant 0 : index
      %c0_43 = arith.constant 0 : index
      %91 = vector.load %arg2[%c0_41, %c0_42, %c0_43] : memref<1x8x32xbf16, #tpu.memory_space<vmem>>, vector<1x8x32xbf16>
      %92 = vector.shape_cast %91 : vector<1x8x32xbf16> to vector<8x32xbf16>
      %c0_44 = arith.constant 0 : index
      %c0_45 = arith.constant 0 : index
      %93 = vector.load %arg6[%c0_44, %c0_45] : memref<32x128xbf16, #tpu.memory_space<vmem>>, vector<32x96xbf16>
      %cst_46 = arith.constant dense<0.000000e+00> : vector<8x96xf32>
      %94 = tpu.matmul %92, %93, %cst_46 {dimension_numbers = #tpu.dot_dimension_numbers<[1], [0], [0], [1], [0, 0, 1, 1], [], []>} : vector<8x32xbf16>, vector<32x96xbf16>, vector<8x96xf32> -> vector<8x96xf32>
      %95 = vector.extract_strided_slice %0 {offsets = [0, 0], sizes = [1, 96], strides = [1, 1]} : vector<1x128xf32> to vector<1x96xf32>
      %96 = vector.broadcast %95 : vector<1x96xf32> to vector<8x96xf32>
      %97 = arith.addf %94, %96 : vector<8x96xf32>
      %98 = arith.truncf %97 : vector<8x96xf32> to vector<8x96xbf16>
      %c0_47 = arith.constant 0 : index
      %c0_48 = arith.constant 0 : index
      %99 = vector.load %arg7[%c0_47, %c0_48] : memref<8x96xbf16, #tpu.memory_space<vmem>>, vector<8x96xbf16>
      tpu.vector_store %arg7[%c0_47, %c0_48], %98 {strides = array<i32>} : memref<8x96xbf16, #tpu.memory_space<vmem>>, vector<8x96xbf16>,
    } else {
    }
    %c8_i32 = arith.constant 8 : i32
    %4 = arith.muli %arg1, %c8_i32 : i32
    %5 = tpu.assume_multiple %4, 8 : i32
    %6 = arith.index_cast %5 : i32 to index
    %c0_2 = arith.constant 0 : index
    %7 = vector.load %arg7[%6, %c0_2] : memref<8x96xbf16, #tpu.memory_space<vmem>>, vector<8x8xbf16>
    %c0_3 = arith.constant 0 : index
    %c32 = arith.constant 32 : index
    %8 = vector.load %arg7[%c0_3, %c32] : memref<8x96xbf16, #tpu.memory_space<vmem>>, vector<8x8xbf16>
    %c0_4 = arith.constant 0 : index
    %c64 = arith.constant 64 : index
    %9 = vector.load %arg7[%c0_4, %c64] : memref<8x96xbf16, #tpu.memory_space<vmem>>, vector<8x8xbf16>
    %cst = arith.constant dense<0.000000e+00> : vector<8x8xf32>
    %10 = tpu.matmul %7, %8, %cst {dimension_numbers = #tpu.dot_dimension_numbers<[1], [1], [0], [0], [0, 0, 1, 0], [], []>} : vector<8x8xbf16>, vector<8x8xbf16>, vector<8x8xf32> -> vector<8x8xf32>
    %cst_5 = arith.constant dense<0xFF800000> : vector<8xf32>
    %11 = vector.multi_reduction <maximumf>, %10, %cst_5 [1] : vector<8x8xf32> to vector<8xf32>
    %12 = vector.shape_cast %11 : vector<8xf32> to vector<8x1xf32>
    %13 = vector.broadcast %12 : vector<8x1xf32> to vector<8x8xf32>
    %14 = arith.subf %10, %13 : vector<8x8xf32>
    %15 = math.exp %14 : vector<8x8xf32>
    %cst_6 = arith.constant dense<0.000000e+00> : vector<8xf32>
    %16 = vector.multi_reduction <add>, %15, %cst_6 [1] : vector<8x8xf32> to vector<8xf32>
    %17 = vector.shape_cast %16 : vector<8xf32> to vector<8x1xf32>
    %18 = tpu.reciprocal %17 {approx = true} : vector<8x1xf32> -> vector<8x1xf32>
    %19 = vector.broadcast %18 : vector<8x1xf32> to vector<8x8xf32>
    %20 = arith.mulf %15, %19 : vector<8x8xf32>
    %21 = arith.truncf %20 : vector<8x8xf32> to vector<8x8xbf16>
    %cst_7 = arith.constant dense<0.000000e+00> : vector<8x8xf32>
    %22 = tpu.matmul %21, %9, %cst_7 {dimension_numbers = #tpu.dot_dimension_numbers<[1], [0], [0], [1], [0, 0, 1, 1], [], []>} : vector<8x8xbf16>, vector<8x8xbf16>, vector<8x8xf32> -> vector<8x8xf32>
    %23 = arith.truncf %22 : vector<8x8xf32> to vector<8x8xbf16>
    %c0_8 = arith.constant 0 : index
    %c0_9 = arith.constant 0 : index
    %24 = vector.load %arg8[%c0_8, %c0_9] : memref<8x32xbf16, #tpu.memory_space<vmem>>, vector<8x8xbf16>
    tpu.vector_store %arg8[%c0_8, %c0_9], %23 {strides = array<i32>} : memref<8x32xbf16, #tpu.memory_space<vmem>>, vector<8x8xbf16>,
    %25 = arith.index_cast %5 : i32 to index
    %c8 = arith.constant 8 : index
    %26 = vector.load %arg7[%25, %c8] : memref<8x96xbf16, #tpu.memory_space<vmem>>, vector<8x8xbf16>
    %c0_10 = arith.constant 0 : index
    %c40 = arith.constant 40 : index
    %27 = vector.load %arg7[%c0_10, %c40] : memref<8x96xbf16, #tpu.memory_space<vmem>>, vector<8x8xbf16>
    %c0_11 = arith.constant 0 : index
    %c72 = arith.constant 72 : index
    %28 = vector.load %arg7[%c0_11, %c72] : memref<8x96xbf16, #tpu.memory_space<vmem>>, vector<8x8xbf16>
    %cst_12 = arith.constant dense<0.000000e+00> : vector<8x8xf32>
    %29 = tpu.matmul %26, %27, %cst_12 {dimension_numbers = #tpu.dot_dimension_numbers<[1], [1], [0], [0], [0, 0, 1, 0], [], []>} : vector<8x8xbf16>, vector<8x8xbf16>, vector<8x8xf32> -> vector<8x8xf32>
    %cst_13 = arith.constant dense<0xFF800000> : vector<8xf32>
    %30 = vector.multi_reduction <maximumf>, %29, %cst_13 [1] : vector<8x8xf32> to vector<8xf32>
    %31 = vector.shape_cast %30 : vector<8xf32> to vector<8x1xf32>
    %32 = vector.broadcast %31 : vector<8x1xf32> to vector<8x8xf32>
    %33 = arith.subf %29, %32 : vector<8x8xf32>
    %34 = math.exp %33 : vector<8x8xf32>
    %cst_14 = arith.constant dense<0.000000e+00> : vector<8xf32>
    %35 = vector.multi_reduction <add>, %34, %cst_14 [1] : vector<8x8xf32> to vector<8xf32>
    %36 = vector.shape_cast %35 : vector<8xf32> to vector<8x1xf32>
    %37 = tpu.reciprocal %36 {approx = true} : vector<8x1xf32> -> vector<8x1xf32>
    %38 = vector.broadcast %37 : vector<8x1xf32> to vector<8x8xf32>
    %39 = arith.mulf %34, %38 : vector<8x8xf32>
    %40 = arith.truncf %39 : vector<8x8xf32> to vector<8x8xbf16>
    %cst_15 = arith.constant dense<0.000000e+00> : vector<8x8xf32>
    %41 = tpu.matmul %40, %28, %cst_15 {dimension_numbers = #tpu.dot_dimension_numbers<[1], [0], [0], [1], [0, 0, 1, 1], [], []>} : vector<8x8xbf16>, vector<8x8xbf16>, vector<8x8xf32> -> vector<8x8xf32>
    %42 = arith.truncf %41 : vector<8x8xf32> to vector<8x8xbf16>
    %c0_16 = arith.constant 0 : index
    %c8_17 = arith.constant 8 : index
    %43 = vector.load %arg8[%c0_16, %c8_17] : memref<8x32xbf16, #tpu.memory_space<vmem>>, vector<8x8xbf16>
    tpu.vector_store %arg8[%c0_16, %c8_17], %42 {strides = array<i32>} : memref<8x32xbf16, #tpu.memory_space<vmem>>, vector<8x8xbf16>,
    %44 = arith.index_cast %5 : i32 to index
    %c16 = arith.constant 16 : index
    %45 = vector.load %arg7[%44, %c16] : memref<8x96xbf16, #tpu.memory_space<vmem>>, vector<8x8xbf16>
    %c0_18 = arith.constant 0 : index
    %c48 = arith.constant 48 : index
    %46 = vector.load %arg7[%c0_18, %c48] : memref<8x96xbf16, #tpu.memory_space<vmem>>, vector<8x8xbf16>
    %c0_19 = arith.constant 0 : index
    %c80 = arith.constant 80 : index
    %47 = vector.load %arg7[%c0_19, %c80] : memref<8x96xbf16, #tpu.memory_space<vmem>>, vector<8x8xbf16>
    %cst_20 = arith.constant dense<0.000000e+00> : vector<8x8xf32>
    %48 = tpu.matmul %45, %46, %cst_20 {dimension_numbers = #tpu.dot_dimension_numbers<[1], [1], [0], [0], [0, 0, 1, 0], [], []>} : vector<8x8xbf16>, vector<8x8xbf16>, vector<8x8xf32> -> vector<8x8xf32>
    %cst_21 = arith.constant dense<0xFF800000> : vector<8xf32>
    %49 = vector.multi_reduction <maximumf>, %48, %cst_21 [1] : vector<8x8xf32> to vector<8xf32>
    %50 = vector.shape_cast %49 : vector<8xf32> to vector<8x1xf32>
    %51 = vector.broadcast %50 : vector<8x1xf32> to vector<8x8xf32>
    %52 = arith.subf %48, %51 : vector<8x8xf32>
    %53 = math.exp %52 : vector<8x8xf32>
    %cst_22 = arith.constant dense<0.000000e+00> : vector<8xf32>
    %54 = vector.multi_reduction <add>, %53, %cst_22 [1] : vector<8x8xf32> to vector<8xf32>
    %55 = vector.shape_cast %54 : vector<8xf32> to vector<8x1xf32>
    %56 = tpu.reciprocal %55 {approx = true} : vector<8x1xf32> -> vector<8x1xf32>
    %57 = vector.broadcast %56 : vector<8x1xf32> to vector<8x8xf32>
    %58 = arith.mulf %53, %57 : vector<8x8xf32>
    %59 = arith.truncf %58 : vector<8x8xf32> to vector<8x8xbf16>
    %cst_23 = arith.constant dense<0.000000e+00> : vector<8x8xf32>
    %60 = tpu.matmul %59, %47, %cst_23 {dimension_numbers = #tpu.dot_dimension_numbers<[1], [0], [0], [1], [0, 0, 1, 1], [], []>} : vector<8x8xbf16>, vector<8x8xbf16>, vector<8x8xf32> -> vector<8x8xf32>
    %61 = arith.truncf %60 : vector<8x8xf32> to vector<8x8xbf16>
    %c0_24 = arith.constant 0 : index
    %c16_25 = arith.constant 16 : index
    %62 = vector.load %arg8[%c0_24, %c16_25] : memref<8x32xbf16, #tpu.memory_space<vmem>>, vector<8x8xbf16>
    tpu.vector_store %arg8[%c0_24, %c16_25], %61 {strides = array<i32>} : memref<8x32xbf16, #tpu.memory_space<vmem>>, vector<8x8xbf16>,
    %63 = arith.index_cast %5 : i32 to index
    %c24 = arith.constant 24 : index
    %64 = vector.load %arg7[%63, %c24] : memref<8x96xbf16, #tpu.memory_space<vmem>>, vector<8x8xbf16>
    %c0_26 = arith.constant 0 : index
    %c56 = arith.constant 56 : index
    %65 = vector.load %arg7[%c0_26, %c56] : memref<8x96xbf16, #tpu.memory_space<vmem>>, vector<8x8xbf16>
    %c0_27 = arith.constant 0 : index
    %c88 = arith.constant 88 : index
    %66 = vector.load %arg7[%c0_27, %c88] : memref<8x96xbf16, #tpu.memory_space<vmem>>, vector<8x8xbf16>
    %cst_28 = arith.constant dense<0.000000e+00> : vector<8x8xf32>
    %67 = tpu.matmul %64, %65, %cst_28 {dimension_numbers = #tpu.dot_dimension_numbers<[1], [1], [0], [0], [0, 0, 1, 0], [], []>} : vector<8x8xbf16>, vector<8x8xbf16>, vector<8x8xf32> -> vector<8x8xf32>
    %cst_29 = arith.constant dense<0xFF800000> : vector<8xf32>
    %68 = vector.multi_reduction <maximumf>, %67, %cst_29 [1] : vector<8x8xf32> to vector<8xf32>
    %69 = vector.shape_cast %68 : vector<8xf32> to vector<8x1xf32>
    %70 = vector.broadcast %69 : vector<8x1xf32> to vector<8x8xf32>
    %71 = arith.subf %67, %70 : vector<8x8xf32>
    %72 = math.exp %71 : vector<8x8xf32>
    %cst_30 = arith.constant dense<0.000000e+00> : vector<8xf32>
    %73 = vector.multi_reduction <add>, %72, %cst_30 [1] : vector<8x8xf32> to vector<8xf32>
    %74 = vector.shape_cast %73 : vector<8xf32> to vector<8x1xf32>
    %75 = tpu.reciprocal %74 {approx = true} : vector<8x1xf32> -> vector<8x1xf32>
    %76 = vector.broadcast %75 : vector<8x1xf32> to vector<8x8xf32>
    %77 = arith.mulf %72, %76 : vector<8x8xf32>
    %78 = arith.truncf %77 : vector<8x8xf32> to vector<8x8xbf16>
    %cst_31 = arith.constant dense<0.000000e+00> : vector<8x8xf32>
    %79 = tpu.matmul %78, %66, %cst_31 {dimension_numbers = #tpu.dot_dimension_numbers<[1], [0], [0], [1], [0, 0, 1, 1], [], []>} : vector<8x8xbf16>, vector<8x8xbf16>, vector<8x8xf32> -> vector<8x8xf32>
    %80 = arith.truncf %79 : vector<8x8xf32> to vector<8x8xbf16>
    %c0_32 = arith.constant 0 : index
    %c24_33 = arith.constant 24 : index
    %81 = vector.load %arg8[%c0_32, %c24_33] : memref<8x32xbf16, #tpu.memory_space<vmem>>, vector<8x8xbf16>
    tpu.vector_store %arg8[%c0_32, %c24_33], %80 {strides = array<i32>} : memref<8x32xbf16, #tpu.memory_space<vmem>>, vector<8x8xbf16>,
    %c0_34 = arith.constant 0 : index
    %c0_35 = arith.constant 0 : index
    %82 = vector.load %arg8[%c0_34, %c0_35] : memref<8x32xbf16, #tpu.memory_space<vmem>>, vector<8x32xbf16>
    %c0_36 = arith.constant 0 : index
    %c96 = arith.constant 96 : index
    %83 = vector.load %arg6[%c0_36, %c96] : memref<32x128xbf16, #tpu.memory_space<vmem>>, vector<32x32xbf16>
    %cst_37 = arith.constant dense<0.000000e+00> : vector<8x32xf32>
    %84 = tpu.matmul %82, %83, %cst_37 {dimension_numbers = #tpu.dot_dimension_numbers<[1], [0], [0], [1], [0, 0, 1, 1], [], []>} : vector<8x32xbf16>, vector<32x32xbf16>, vector<8x32xf32> -> vector<8x32xf32>
    %85 = vector.extract_strided_slice %0 {offsets = [0, 96], sizes = [1, 32], strides = [1, 1]} : vector<1x128xf32> to vector<1x32xf32>
    %86 = vector.broadcast %85 : vector<1x32xf32> to vector<8x32xf32>
    %87 = arith.addf %84, %86 : vector<8x32xf32>
    %c0_38 = arith.constant 0 : index
    %c0_39 = arith.constant 0 : index
    %c0_40 = arith.constant 0 : index
    %88 = vector.load %arg5[%c0_38, %c0_39, %c0_40] : memref<1x8x32xf32, #tpu.memory_space<vmem>>, vector<1x8x32xf32>
    %89 = vector.shape_cast %88 : vector<1x8x32xf32> to vector<8x32xf32>
    %90 = vector.shape_cast %87 : vector<8x32xf32> to vector<1x8x32xf32>
    tpu.vector_store %arg5[%c0_38, %c0_39, %c0_40], %90 {strides = array<i32>} : memref<1x8x32xf32, #tpu.memory_space<vmem>>, vector<1x8x32xf32>,
    return
  }
  func.func @transform_0(%arg0: i32, %arg1: i32) -> (i32, i32, i32) {
    %c0_i32 = arith.constant 0 : i32
    %c0_i32_0 = arith.constant 0 : i32
    %c0_i32_1 = arith.constant 0 : i32
    return %arg0, %c0_i32, %c0_i32_0 : i32, i32, i32
  }
  func.func @transform_2(%arg0: i32, %arg1: i32) -> (i32, i32) {
    %c0_i32 = arith.constant 0 : i32
    %c0_i32_0 = arith.constant 0 : i32
    %c0_i32_1 = arith.constant 0 : i32
    return %c0_i32, %c0_i32_0 : i32, i32
  }
  func.func @transform_3(%arg0: i32, %arg1: i32) -> (i32, i32, i32) {
    %c0_i32 = arith.constant 0 : i32
    %c0_i32_0 = arith.constant 0 : i32
    return %arg0, %arg1, %c0_i32 : i32, i32, i32
  }
}

</mosaic_0001>

<llo_original>
// kernel: tpu_custom_call.1
$region0: #{tpu_custom_call.1}
  #allocation0 [shape = 'u32[]', space=smem, size = 0x4, offset = 0x4, fixed_abs, tag = 'smem constant byte address 0x4 - core index']
  #allocation1 [shape = 'u32[72,128]{1,0:T(1,128)}', space=vmem, size = 0x9000, scoped, tag = 'internal scratch']
  #allocation2 [shape = 'bf16[32,128]{1,0:T(8,128)(2,1)}', space=vmem, size = 0x2000, scoped, tag = 'scratch operand']
  #allocation3 [shape = 'bf16[8,96]{1,0:T(8,128)(2,1)}', space=vmem, size = 0x800, scoped, tag = 'scratch operand']
  #allocation4 [shape = 'bf16[8,32]{1,0:T(8,128)(2,1)}', space=vmem, size = 0x800, scoped, tag = 'scratch operand']
  #allocation10 [shape = 's32[]', space=sflag, size = 0x4, offset = 0, fixed_abs, tag = 'sflag constant byte address 0x0 - dummy sync flag']
  #allocation11 [shape = 's32[]', space=sflag, size = 0x4, offset = 0, fixed_abs, tag = 'sflag constant byte address 0x0 - dummy sync flag']
  #allocation12 [shape = 'u32[]', space=smem, size = 0x4, offset = 0x44, fixed_abs, tag = 'smem constant byte address 0x44 - assertion arg 0']
  #allocation13 [shape = 'u32[]', space=smem, size = 0x4, offset = 0x48, fixed_abs, tag = 'smem constant byte address 0x48 - assertion arg 1']
  %s0 = inlined_call_operand.hbm [shape: bf16[2,8,32], index: 0, kind: input, shape index: {}]
  %s1 = inlined_call_operand.hbm [shape: bf16[32,128], index: 1, kind: input, shape index: {}]
  %s2 = inlined_call_operand.vmem [shape: f32[1,128], index: 2, kind: input, shape index: {}]
  %s3 = inlined_call_operand.hbm [shape: f32[2,8,32], index: 3, kind: output, shape index: {}]
  %s4 = sld [smem:[#allocation0]]
  $region54: #{tpu_custom_call.1} parent=0
    _
  %s6 = ssub.s32 1, %s4
  %s7 = scalar_select 0, %s6, %s4
  $region1: #{tpu_custom_call.1} parent=0
    #allocation5 [shape = 'u8[4096]{0}', space=vmem, size = 0x1000, scoped, tag = 'input window, operand 0']
    #allocation6 [shape = 's32[2]{0}', space=sflag, size = 0x8, scoped, tag = 'scoped memory for tpu_custom_call.1']
    #allocation7 [shape = 's32[2]{0}', space=sflag, size = 0x8, scoped, tag = 'scoped memory for tpu_custom_call.1']
    #allocation8 [shape = 'u8[8192]{0}', space=vmem, size = 0x2000, scoped, tag = 'output window, operand 0']
    %8 = vsyncpa [#allocation6], 0
    %s9 = scalar_lea.sflag [#allocation6], 1
    %10 = vsyncpa %s9, 0
    %11 = vsyncpa [#allocation7], 0
    %s12 = scalar_lea.sflag [#allocation7], 1
    %13 = vsyncpa %s12, 0
    loop: start=0, step=1, limit=4
    $region2: #{tpu_custom_call.1} parent=1 // loop_pre_header
      _
    $region3: #{tpu_custom_call.1} parent=1 // loop_header
      %s15 = sphi 0, %s19
      %p16 = scmp.ge.s32.totalorder %s15, 4
      %s22 = sphi 0, %s34
      %s23 = sphi 0, %s30
      %s24 = sphi 0, %s22
      %s25 = sphi 0, %s23
      %s26 = sphi 0, %s24
      %s27 = sphi 0, %s25
      %s37 = sphi 0, %s39
      %s40 = sphi 0, %s37
      %s41 = sphi 0, %s40
      %s57 = sphi 0, %s41
      %s61 = sphi 0, %s61
      %s63 = sphi 0, %s61
      %s64 = sphi 0, %s63
      %s78 = sphi 0, %s64
      %s86 = sphi 0, %s88
      %s89 = sphi 0, %s86
      %s90 = sphi 0, %s89
      %s106 = sphi 0, %s90
    $region4: #{tpu_custom_call.1} parent=1 // loop_header_branch
      %18 = sbr.rel (%p16) target = $region8
    $region5: #{tpu_custom_call.1} parent=1 // loop_body
      %s20 = ssub.s32 %s15, 1
      %s21 = ssub.s32 %s15, 2
      %s28 = sadd.s32 1, %s23
      %p29 = scmp.ge.s32.totalorder %s28, 1
      %s30 = scalar_select %p29, 0, %s28
      %s31 = sadd.s32 1, %s22
      %s32 = scalar_select %p29, %s31, %s22
      %p33 = scmp.ge.s32.totalorder %s32, 2
      %s34 = scalar_select %p33, 0, %s32
      %s35 = ssub.s32 %s22, %s34
      %p36 = scmp.eq.s32.totalorder %s35, 0
      %s38 = sadd.s32 %s37, 1
      %s39 = scalar_select %p36, %s37, %s38
      %p42 = pneg %p36
      %p43 = scmp.eq.s32.totalorder %s15, 1
      %p44 = por %p42, %p43
      %p45 = scmp.ne.s32.totalorder %s37, %s40
      %p46 = scmp.eq.s32.totalorder %s15, 0
      %p47 = por %p45, %p46
      %p48 = scmp.ne.s32.totalorder %s37, %s40
      %p49 = scmp.eq.s32.totalorder %s20, 1
      %p50 = por %p48, %p49
      %p51 = scmp.ne.s32.totalorder %s40, %s41
      %p52 = scmp.eq.s32.totalorder %s20, 0
      %p53 = por %p51, %p52
      %p54 = scmp.ne.s32.totalorder %s40, %s41
      %p55 = scmp.eq.s32.totalorder %s21, 1
      %p56 = por %p54, %p55
      %p58 = scmp.ne.s32.totalorder %s41, %s57
      %p59 = scmp.eq.s32.totalorder %s21, 0
      %p60 = por %p58, %p59
      %s62 = sadd.s32 %s61, 1
      %p65 = scmp.eq.s32.totalorder %s15, 1
      %p66 = scmp.ne.s32.totalorder %s61, %s63
      %p67 = scmp.eq.s32.totalorder %s15, 0
      %p68 = por %p66, %p67
      %p69 = scmp.ne.s32.totalorder %s61, %s63
      %p70 = scmp.eq.s32.totalorder %s20, 1
      %p71 = por %p69, %p70
      %p72 = scmp.ne.s32.totalorder %s63, %s64
      %p73 = scmp.eq.s32.totalorder %s20, 0
      %p74 = por %p72, %p73
      %p75 = scmp.ne.s32.totalorder %s63, %s64
      %p76 = scmp.eq.s32.totalorder %s21, 1
      %p77 = por %p75, %p76
      %p79 = scmp.ne.s32.totalorder %s64, %s78
      %p80 = scmp.eq.s32.totalorder %s21, 0
      %p81 = por %p79, %p80
      %s82 = ssub.s32 %s22, %s34
      %s83 = ssub.s32 %s23, %s30
      %s84 = sor.u32 %s82, %s83
      %p85 = scmp.eq.s32.totalorder %s84, 0
      %s87 = sadd.s32 %s86, 1
      %s88 = scalar_select %p85, %s86, %s87
      %p91 = pneg %p85
      %p92 = scmp.eq.s32.totalorder %s15, 1
      %p93 = por %p91, %p92
      %p94 = scmp.ne.s32.totalorder %s86, %s89
      %p95 = scmp.eq.s32.totalorder %s15, 0
      %p96 = por %p94, %p95
      %p97 = scmp.ne.s32.totalorder %s86, %s89
      %p98 = scmp.eq.s32.totalorder %s20, 1
      %p99 = por %p97, %p98
      %p100 = scmp.ne.s32.totalorder %s89, %s90
      %p101 = scmp.eq.s32.totalorder %s20, 0
      %p102 = por %p100, %p101
      %p103 = scmp.ne.s32.totalorder %s89, %s90
      %p104 = scmp.eq.s32.totalorder %s21, 1
      %p105 = por %p103, %p104
      %p107 = scmp.ne.s32.totalorder %s90, %s106
      %p108 = scmp.eq.s32.totalorder %s21, 0
      %p109 = por %p107, %p108
      %p110 = scmp.le.s32.totalorder 1, %s15
      %p111 = scmp.lt.s32.totalorder %s15, 3
      %p112 = pnand %p110, %p111
      %p113 = pneg %p112
      // Predicated region
      $region9: #{tpu_custom_call.1} parent=5 // pred_check
        _
      $region10: #{tpu_custom_call.1} parent=5 // pred_check_branch
        %115 = sbr.rel (%p112) target = $region12
      $region11: #{tpu_custom_call.1} parent=5 // pred_region
        %s116 = ssub.s32 %s15, 1
        // Predicated region
        $region13: #{tpu_custom_call.1} parent=11 // pred_check
          %p117 = pneg %p74
        $region14: #{tpu_custom_call.1} parent=11 // pred_check_branch
          %119 = sbr.rel (%p117) target = $region16
        $region15: #{tpu_custom_call.1} parent=11 // pred_region
          _
        $region16: #{tpu_custom_call.1} parent=11 // pred_fallthru
          _
      $region12: #{tpu_custom_call.1} parent=5 // pred_fallthru
        _
      %p120 = scmp.lt.s32.totalorder %s15, 2
      // Predicated region
      $region17: #{tpu_custom_call.1} parent=5 // pred_check
        %p121 = pneg %p120
      $region18: #{tpu_custom_call.1} parent=5 // pred_check_branch
        %123 = sbr.rel (%p121) target = $region20
      $region19: #{tpu_custom_call.1} parent=5 // pred_region
        // Predicated region
        $region21: #{tpu_custom_call.1} parent=19 // pred_check
          %p124 = pneg %p47
        $region22: #{tpu_custom_call.1} parent=19 // pred_check_branch
          %126 = sbr.rel (%p124) target = $region24
        $region23: #{tpu_custom_call.1} parent=19 // pred_region
          %s127 = sand.u32 %s37, 1
          %s128 = scalar_lea.sflag [#allocation6], %s127
          %s129 = sand.u32 %s37, 1
          %s130 = smul.addr %s129, 4
          %s131 = scalar_lea.vmem [#allocation5], %s130
          %133 = vsyncadd %s128, 0
          %s134 = smul.addr %s22, 4
          %s135 = scalar_lea.hbm %s0, %s134
          %s137 = sshll.u32 %s135, 4
          %s138 = int_to_ptr.hbm [resolvable:$true] %s137
          %s139 = sshll.u32 %s131, 4
          %s140 = int_to_ptr.vmem [resolvable:$true] %s139
          %142 = dma.hbm_to_vmem [thread:$0]  %s138, 64, %s140, %s128
        $region24: #{tpu_custom_call.1} parent=19 // pred_fallthru
          _
      $region20: #{tpu_custom_call.1} parent=5 // pred_fallthru
        _
      %p143 = scmp.le.s32.totalorder 1, %s15
      %p144 = scmp.lt.s32.totalorder %s15, 3
      %p145 = pnand %p143, %p144
      %p146 = pneg %p145
      // Predicated region
      $region25: #{tpu_custom_call.1} parent=5 // pred_check
        _
      $region26: #{tpu_custom_call.1} parent=5 // pred_check_branch
        %148 = sbr.rel (%p145) target = $region28
      $region27: #{tpu_custom_call.1} parent=5 // pred_region
        %s149 = ssub.s32 %s15, 1
        %s150 = sand.u32 %s40, 1
        %s151 = scalar_lea.sflag [#allocation6], %s150
        %s152 = sand.u32 %s40, 1
        %s153 = smul.addr %s152, 4
        %s154 = scalar_lea.vmem [#allocation5], %s153
        // Predicated region
        $region29: #{tpu_custom_call.1} parent=27 // pred_check
          %p155 = pneg %p53
        $region30: #{tpu_custom_call.1} parent=27 // pred_check_branch
          %157 = sbr.rel (%p155) target = $region32
        $region31: #{tpu_custom_call.1} parent=27 // pred_region
          %159 = dma.done %s151, 64
        $region32: #{tpu_custom_call.1} parent=27 // pred_fallthru
          _
        %s160 = sand.u32 %s40, 1
        %s161 = scalar_lea.sflag [#allocation6], %s160
        %s162 = sand.u32 %s40, 1
        %s163 = smul.addr %s162, 4
        %s164 = scalar_lea.vmem [#allocation5], %s163
        %p165 = pneg %p53
        %p166 = pneg %p50
        %p167 = pneg %p74
        %p168 = pneg %p71
        %p169 = pneg %p102
        %p170 = pneg %p99
        %s171 = sand.u32 %s89, 1
        %s172 = scalar_lea.sflag [#allocation7], %s171
        %s173 = sand.u32 %s89, 1
        %s174 = smul.addr %s173, 8
        %s175 = scalar_lea.vmem [#allocation8], %s174
        %v177 = vld [vmem:[%s2] sm:$0x1]
        %p178 = scmp.eq.s32.totalorder %s25, 0
        // Predicated region
        $region33: #{tpu_custom_call.1} parent=27 // pred_check
          %p179 = pneg %p178
        $region34: #{tpu_custom_call.1} parent=27 // pred_check_branch
          %181 = sbr.rel (%p179) target = $region36
        $region35: #{tpu_custom_call.1} parent=27 // pred_region
          $region37: #{tpu_custom_call.1} parent=35
            #allocation9 [shape = 's32[1]{0}', space=sflag, size = 0x4, scoped, tag = 'scoped memory for tpu_custom_call.1']
            // Predicated region
            $region38: #{tpu_custom_call.1} parent=37 // pred_check
              _
            $region39: #{tpu_custom_call.1} parent=37 // pred_check_branch
              %183 = sbr.rel target = $region41
            $region40: #{tpu_custom_call.1} parent=37 // pred_region
              %184 = sst [smem:[#allocation12]] [#allocation11]
              %185 = sst [smem:[#allocation13]] [#allocation10]
            $region41: #{tpu_custom_call.1} parent=37 // pred_fallthru
              _
            %187 = shalt.err (0)
            %s189 = sshll.u32 %s1, 4
            %s190 = int_to_ptr.hbm [resolvable:$true] %s189
            %s191 = sshll.u32 [#allocation2], 4
            %s192 = int_to_ptr.vmem [resolvable:$true] %s191
            %194 = dma.hbm_to_vmem [thread:$0]  %s190, 256, %s192, [#allocation9]
            %s195 = smul.u32 4, 4
            %s196 = smul.u32 %s195, 1
            %s197 = sshll.u32 %s196, 4
            %198 = dma.done [#allocation9], %s197
          %v199 = vld [vmem:[%s154] sm:$0xf]
          %v200 = vld [vmem:[#allocation2] sm:$0xf]
          %v201 = vld [vmem:[#allocation2 + $0x4] sm:$0xf]
          %v202 = vld [vmem:[#allocation2 + $0x8] sm:$0xf]
          %v203 = vld [vmem:[#allocation2 + $0xc] sm:$0xf]
          %v205 = vperm.slane %v177, 0
          %v211 = vunpack.c.l.b16 %v200
          %v212 = vunpack.c.l.b16 %v201
          %v213 = vunpack.c.l.b16 %v202
          %v214 = vunpack.c.l.b16 %v203
          %v215 = vpack.c.b16 %v212, %v211
          %v216 = vpack.c.b16 %v214, %v213
          %vm219 = vcmask 261120
          %v221 = vsel %vm219, %v199, 0
          %223 = vmatpush.bf16.msra.mxu0 0
          %224 = vmatpush.bf16.msra.mxu0 0
          %225 = vmatpush.bf16.msra.mxu0 0
          %226 = vmatpush.bf16.msra.mxu0 0
          %227 = vmatpush.bf16.msra.mxu0 0
          %228 = vmatpush.bf16.msra.mxu0 0
          %229 = vmatpush.bf16.msra.mxu0 %v216
          %230 = vmatpush.bf16.msra.mxu0 %v215
          %231 = vmatmul.bf16.gmra.mxu0 %v221
          %v232 = vpop.f32.mrf.mxu0
          %v233 = vadd.f32 %v205, %v232
          %v234 = vpop.f32.mrf.mxu0
          %235 = vdwg.mxu0
          %v236 = vpack.c.bf16 %v233, %v233
          %vm237 = vcmask 781312
          %238 = vst.msk [vmem:[#allocation3] sm:$0xf] %vm237, %v236
        $region36: #{tpu_custom_call.1} parent=27 // pred_fallthru
          _
        %s239 = smul.u32 %s25, 8
        %s240 = sshra.s32 %s239, 3
        %s241 = sand.u32 %s239, 7
        %s242 = smul.addr %s240, 4
        %s243 = scalar_lea.vmem [#allocation3], %s242
        %v244 = vld [vmem:[%s243] sm:$0xf]
        %v245 = vld [vmem:[#allocation3] sm:$0xf]
        %v247 = vunpack.c.l.b16 %v245
        %v248 = vpack.c.b16 %v247, %v247
        %249 = vrot.lane.b32.xlu0 %v248, 96
        %v250 = vpop.permute.xlu0 %249
        %vm251 = vcmask 64512
        %v253 = vsel %vm251, %v244, 0
        %v256 = vsel %vm251, %v250, 0
        %258 = vmatpush.bf16.xpose.msra.mxu0 0
        %259 = vmatpush.bf16.xpose.msra.mxu0 0
        %260 = vmatpush.bf16.xpose.msra.mxu0 0
        %261 = vmatpush.bf16.xpose.msra.mxu0 0
        %262 = vmatpush.bf16.xpose.msra.mxu0 0
        %263 = vmatpush.bf16.xpose.msra.mxu0 0
        %264 = vmatpush.bf16.xpose.msra.mxu0 0
        %265 = vmatpush.bf16.xpose.msra.mxu0 %v256
        %266 = vmatmul.bf16.gmra.mxu0 %v253
        %v267 = vpop.f32.mrf.mxu0
        %v268 = vadd.f32 0.0, %v267
        %v269 = vpop.f32.mrf.mxu0
        %270 = vdwg.mxu0
        %v271 = vsel %vm251, %v268, -inf
        %272 = vmax.xlane.f32.xlu0 %v271
        %v273 = vpop.xlane.xlu0 %272
        %v274 = vsub.f32 %v268, %v273
        %v275 = vmul.f32 %v274, 1.442695
        %v276 = vpow.pop %v275
        %v277 = vsel %vm251, %v276, 0.0
        %278 = vadd.xlane.f32.xlu0 %v277
        %v279 = vpop.xlane.xlu0 %278
        %v280 = vrcp.pop %v279
        %v281 = vmul.f32 %v276, %v280
        %v282 = vpack.c.bf16 %v281, %v281
        %283 = vrot.lane.b32.xlu0 %v248, 64
        %v284 = vpop.permute.xlu0 %283
        %v286 = vsel %vm251, %v282, 0
        %vm288 = vcmask 1043456
        %v290 = vsel %vm288, %v284, 0
        %292 = vmatpush.bf16.msra.mxu0 0
        %293 = vmatpush.bf16.msra.mxu0 0
        %294 = vmatpush.bf16.msra.mxu0 0
        %295 = vmatpush.bf16.msra.mxu0 0
        %296 = vmatpush.bf16.msra.mxu0 0
        %297 = vmatpush.bf16.msra.mxu0 0
        %298 = vmatpush.bf16.msra.mxu0 0
        %299 = vmatpush.bf16.msra.mxu0 %v290
        %300 = vmatmul.bf16.gmra.mxu0 %v286
        %v301 = vpop.f32.mrf.mxu0
        %v302 = vadd.f32 0.0, %v301
        %v303 = vpop.f32.mrf.mxu0
        %304 = vdwg.mxu0
        %v305 = vpack.c.bf16 %v302, %v302
        %vm306 = vcmask 60416
        %307 = vst.msk [vmem:[#allocation4] sm:$0xf] %vm306, %v305
        %v308 = vld [vmem:[%s243] sm:$0xf]
        %v309 = vld [vmem:[#allocation3] sm:$0xf]
        %v311 = vunpack.c.l.b16 %v308
        %v312 = vpack.c.b16 %v311, %v311
        %313 = vrot.lane.b32.xlu0 %v312, 120
        %v314 = vpop.permute.xlu0 %313
        %v316 = vunpack.c.l.b16 %v309
        %v317 = vpack.c.b16 %v316, %v316
        %318 = vrot.lane.b32.xlu0 %v317, 88
        %v319 = vpop.permute.xlu0 %318
        %v321 = vsel %vm251, %v314, 0
        %v324 = vsel %vm251, %v319, 0
        %326 = vmatpush.bf16.xpose.msra.mxu0 0
        %327 = vmatpush.bf16.xpose.msra.mxu0 0
        %328 = vmatpush.bf16.xpose.msra.mxu0 0
        %329 = vmatpush.bf16.xpose.msra.mxu0 0
        %330 = vmatpush.bf16.xpose.msra.mxu0 0
        %331 = vmatpush.bf16.xpose.msra.mxu0 0
        %332 = vmatpush.bf16.xpose.msra.mxu0 0
        %333 = vmatpush.bf16.xpose.msra.mxu0 %v324
        %334 = vmatmul.bf16.gmra.mxu0 %v321
        %v335 = vpop.f32.mrf.mxu0
        %v336 = vadd.f32 0.0, %v335
        %v337 = vpop.f32.mrf.mxu0
        %338 = vdwg.mxu0
        %v339 = vsel %vm251, %v336, -inf
        %340 = vmax.xlane.f32.xlu0 %v339
        %v341 = vpop.xlane.xlu0 %340
        %v342 = vsub.f32 %v336, %v341
        %v343 = vmul.f32 %v342, 1.442695
        %v344 = vpow.pop %v343
        %v345 = vsel %vm251, %v344, 0.0
        %346 = vadd.xlane.f32.xlu0 %v345
        %v347 = vpop.xlane.xlu0 %346
        %v348 = vrcp.pop %v347
        %v349 = vmul.f32 %v344, %v348
        %v350 = vpack.c.bf16 %v349, %v349
        %351 = vrot.lane.b32.xlu0 %v317, 56
        %v352 = vpop.permute.xlu0 %351
        %v354 = vsel %vm251, %v350, 0
        %v357 = vsel %vm288, %v352, 0
        %359 = vmatpush.bf16.msra.mxu0 0
        %360 = vmatpush.bf16.msra.mxu0 0
        %361 = vmatpush.bf16.msra.mxu0 0
        %362 = vmatpush.bf16.msra.mxu0 0
        %363 = vmatpush.bf16.msra.mxu0 0
        %364 = vmatpush.bf16.msra.mxu0 0
        %365 = vmatpush.bf16.msra.mxu0 0
        %366 = vmatpush.bf16.msra.mxu0 %v357
        %367 = vmatmul.bf16.gmra.mxu0 %v354
        %v368 = vpop.f32.mrf.mxu0
        %v369 = vadd.f32 0.0, %v368
        %v370 = vpop.f32.mrf.mxu0
        %371 = vdwg.mxu0
        %v372 = vpack.c.bf16 %v369, %v369
        %374 = vrot.lane.b32.xlu0 %v372, 8
        %v375 = vpop.permute.xlu0 %374
        %vm377 = vcmask 126016
        %378 = vst.msk [vmem:[#allocation4] sm:$0xf] %vm377, %v375
        %v379 = vld [vmem:[%s243] sm:$0xf]
        %v380 = vld [vmem:[#allocation3] sm:$0xf]
        %v382 = vunpack.c.l.b16 %v379
        %v383 = vpack.c.b16 %v382, %v382
        %384 = vrot.lane.b32.xlu0 %v383, 112
        %v385 = vpop.permute.xlu0 %384
        %v387 = vunpack.c.l.b16 %v380
        %v388 = vpack.c.b16 %v387, %v387
        %389 = vrot.lane.b32.xlu0 %v388, 80
        %v390 = vpop.permute.xlu0 %389
        %v392 = vsel %vm251, %v385, 0
        %v395 = vsel %vm251, %v390, 0
        %397 = vmatpush.bf16.xpose.msra.mxu0 0
        %398 = vmatpush.bf16.xpose.msra.mxu0 0
        %399 = vmatpush.bf16.xpose.msra.mxu0 0
        %400 = vmatpush.bf16.xpose.msra.mxu0 0
        %401 = vmatpush.bf16.xpose.msra.mxu0 0
        %402 = vmatpush.bf16.xpose.msra.mxu0 0
        %403 = vmatpush.bf16.xpose.msra.mxu0 0
        %404 = vmatpush.bf16.xpose.msra.mxu0 %v395
        %405 = vmatmul.bf16.gmra.mxu0 %v392
        %v406 = vpop.f32.mrf.mxu0
        %v407 = vadd.f32 0.0, %v406
        %v408 = vpop.f32.mrf.mxu0
        %409 = vdwg.mxu0
        %v410 = vsel %vm251, %v407, -inf
        %411 = vmax.xlane.f32.xlu0 %v410
        %v412 = vpop.xlane.xlu0 %411
        %v413 = vsub.f32 %v407, %v412
        %v414 = vmul.f32 %v413, 1.442695
        %v415 = vpow.pop %v414
        %v416 = vsel %vm251, %v415, 0.0
        %417 = vadd.xlane.f32.xlu0 %v416
        %v418 = vpop.xlane.xlu0 %417
        %v419 = vrcp.pop %v418
        %v420 = vmul.f32 %v415, %v419
        %v421 = vpack.c.bf16 %v420, %v420
        %422 = vrot.lane.b32.xlu0 %v388, 48
        %v423 = vpop.permute.xlu0 %422
        %v425 = vsel %vm251, %v421, 0
        %v428 = vsel %vm288, %v423, 0
        %430 = vmatpush.bf16.msra.mxu0 0
        %431 = vmatpush.bf16.msra.mxu0 0
        %432 = vmatpush.bf16.msra.mxu0 0
        %433 = vmatpush.bf16.msra.mxu0 0
        %434 = vmatpush.bf16.msra.mxu0 0
        %435 = vmatpush.bf16.msra.mxu0 0
        %436 = vmatpush.bf16.msra.mxu0 0
        %437 = vmatpush.bf16.msra.mxu0 %v428
        %438 = vmatmul.bf16.gmra.mxu0 %v425
        %v439 = vpop.f32.mrf.mxu0
        %v440 = vadd.f32 0.0, %v439
        %v441 = vpop.f32.mrf.mxu0
        %442 = vdwg.mxu0
        %v443 = vpack.c.bf16 %v440, %v440
        %445 = vrot.lane.b32.xlu0 %v443, 16
        %v446 = vpop.permute.xlu0 %445
        %vm448 = vcmask 191616
        %449 = vst.msk [vmem:[#allocation4] sm:$0xf] %vm448, %v446
        %v450 = vld [vmem:[%s243] sm:$0xf]
        %v451 = vld [vmem:[#allocation3] sm:$0xf]
        %v453 = vunpack.c.l.b16 %v450
        %v454 = vpack.c.b16 %v453, %v453
        %455 = vrot.lane.b32.xlu0 %v454, 104
        %v456 = vpop.permute.xlu0 %455
        %v458 = vunpack.c.l.b16 %v451
        %v459 = vpack.c.b16 %v458, %v458
        %460 = vrot.lane.b32.xlu0 %v459, 72
        %v461 = vpop.permute.xlu0 %460
        %v463 = vsel %vm251, %v456, 0
        %v466 = vsel %vm251, %v461, 0
        %468 = vmatpush.bf16.xpose.msra.mxu0 0
        %469 = vmatpush.bf16.xpose.msra.mxu0 0
        %470 = vmatpush.bf16.xpose.msra.mxu0 0
        %471 = vmatpush.bf16.xpose.msra.mxu0 0
        %472 = vmatpush.bf16.xpose.msra.mxu0 0
        %473 = vmatpush.bf16.xpose.msra.mxu0 0
        %474 = vmatpush.bf16.xpose.msra.mxu0 0
        %475 = vmatpush.bf16.xpose.msra.mxu0 %v466
        %476 = vmatmul.bf16.gmra.mxu0 %v463
        %v477 = vpop.f32.mrf.mxu0
        %v478 = vadd.f32 0.0, %v477
        %v479 = vpop.f32.mrf.mxu0
        %480 = vdwg.mxu0
        %v481 = vsel %vm251, %v478, -inf
        %482 = vmax.xlane.f32.xlu0 %v481
        %v483 = vpop.xlane.xlu0 %482
        %v484 = vsub.f32 %v478, %v483
        %v485 = vmul.f32 %v484, 1.442695
        %v486 = vpow.pop %v485
        %v487 = vsel %vm251, %v486, 0.0
        %488 = vadd.xlane.f32.xlu0 %v487
        %v489 = vpop.xlane.xlu0 %488
        %v490 = vrcp.pop %v489
        %v491 = vmul.f32 %v486, %v490
        %v492 = vpack.c.bf16 %v491, %v491
        %493 = vrot.lane.b32.xlu0 %v459, 40
        %v494 = vpop.permute.xlu0 %493
        %v496 = vsel %vm251, %v492, 0
        %v499 = vsel %vm288, %v494, 0
        %501 = vmatpush.bf16.msra.mxu0 0
        %502 = vmatpush.bf16.msra.mxu0 0
        %503 = vmatpush.bf16.msra.mxu0 0
        %504 = vmatpush.bf16.msra.mxu0 0
        %505 = vmatpush.bf16.msra.mxu0 0
        %506 = vmatpush.bf16.msra.mxu0 0
        %507 = vmatpush.bf16.msra.mxu0 0
        %508 = vmatpush.bf16.msra.mxu0 %v499
        %509 = vmatmul.bf16.gmra.mxu0 %v496
        %v510 = vpop.f32.mrf.mxu0
        %v511 = vadd.f32 0.0, %v510
        %v512 = vpop.f32.mrf.mxu0
        %513 = vdwg.mxu0
        %v514 = vpack.c.bf16 %v511, %v511
        %516 = vrot.lane.b32.xlu0 %v514, 24
        %v517 = vpop.permute.xlu0 %516
        %vm519 = vcmask 257216
        %520 = vst.msk [vmem:[#allocation4] sm:$0xf] %vm519, %v517
        %v521 = vld [vmem:[#allocation4] sm:$0xf]
        %v522 = vld [vmem:[#allocation2] sm:$0xf]
        %v523 = vld [vmem:[#allocation2 + $0x4] sm:$0xf]
        %v524 = vld [vmem:[#allocation2 + $0x8] sm:$0xf]
        %v525 = vld [vmem:[#allocation2 + $0xc] sm:$0xf]
        %v527 = vperm.slane %v177, 0
        %v532 = vunpack.c.l.b16 %v522
        %v533 = vunpack.c.l.b16 %v523
        %v534 = vunpack.c.l.b16 %v524
        %v535 = vunpack.c.l.b16 %v525
        %v536 = vpack.c.b16 %v533, %v532
        %v537 = vpack.c.b16 %v535, %v534
        %538 = vrot.lane.b32.xlu0 %v536, 32
        %v539 = vpop.permute.xlu0 %538
        %540 = vrot.lane.b32.xlu0 %v537, 32
        %v541 = vpop.permute.xlu0 %540
        %544 = vrot.lane.b32.xlu0 %v527, 32
        %v545 = vpop.permute.xlu0 %544
        %vm547 = vcmask 261120
        %v549 = vsel %vm547, %v521, 0
        %551 = vmatpush.bf16.msra.mxu0 0
        %552 = vmatpush.bf16.msra.mxu0 0
        %553 = vmatpush.bf16.msra.mxu0 0
        %554 = vmatpush.bf16.msra.mxu0 0
        %555 = vmatpush.bf16.msra.mxu0 0
        %556 = vmatpush.bf16.msra.mxu0 0
        %557 = vmatpush.bf16.msra.mxu0 %v541
        %558 = vmatpush.bf16.msra.mxu0 %v539
        %559 = vmatmul.bf16.gmra.mxu0 %v549
        %v560 = vpop.f32.mrf.mxu0
        %v561 = vadd.f32 %v545, %v560
        %v562 = vpop.f32.mrf.mxu0
        %563 = vdwg.mxu0
        %564 = vst.msk [vmem:[%s175] sm:$0xff] %vm547, %v561
        %s565 = sand.u32 %s89, 1
        %s566 = scalar_lea.sflag [#allocation7], %s565
        %s567 = sand.u32 %s89, 1
        %s568 = smul.addr %s567, 8
        %s569 = scalar_lea.vmem [#allocation8], %s568
        // Predicated region
        $region42: #{tpu_custom_call.1} parent=27 // pred_check
          %p570 = pneg %p99
        $region43: #{tpu_custom_call.1} parent=27 // pred_check_branch
          %572 = sbr.rel (%p570) target = $region45
        $region44: #{tpu_custom_call.1} parent=27 // pred_region
          %574 = vsyncadd %s566, 0
          %s575 = sadd.s32 %s25, %s24
          %s576 = smul.addr %s575, 8
          %s577 = scalar_lea.hbm %s3, %s576
          %s579 = sshll.u32 %s569, 4
          %s580 = int_to_ptr.vmem [resolvable:$true] %s579
          %s581 = sshll.u32 %s577, 4
          %s582 = int_to_ptr.hbm [resolvable:$true] %s581
          %584 = dma.vmem_to_hbm [thread:$0]  %s580, 128, %s582, %s566
        $region45: #{tpu_custom_call.1} parent=27 // pred_fallthru
          _
      $region28: #{tpu_custom_call.1} parent=5 // pred_fallthru
        _
      %p585 = scmp.le.s32.totalorder 2, %s15
      // Predicated region
      $region46: #{tpu_custom_call.1} parent=5 // pred_check
        %p586 = pneg %p585
      $region47: #{tpu_custom_call.1} parent=5 // pred_check_branch
        %588 = sbr.rel (%p586) target = $region49
      $region48: #{tpu_custom_call.1} parent=5 // pred_region
        %s589 = ssub.s32 %s15, 2
        // Predicated region
        $region50: #{tpu_custom_call.1} parent=48 // pred_check
          %p590 = pneg %p105
        $region51: #{tpu_custom_call.1} parent=48 // pred_check_branch
          %592 = sbr.rel (%p590) target = $region53
        $region52: #{tpu_custom_call.1} parent=48 // pred_region
          %s593 = sand.u32 %s90, 1
          %s594 = scalar_lea.sflag [#allocation7], %s593
          %s595 = sand.u32 %s90, 1
          %s596 = smul.addr %s595, 8
          %s597 = scalar_lea.vmem [#allocation8], %s596
          %599 = dma.done %s594, 128
        $region53: #{tpu_custom_call.1} parent=48 // pred_fallthru
          _
      $region49: #{tpu_custom_call.1} parent=5 // pred_fallthru
        _
    $region6: #{tpu_custom_call.1} parent=1 // loop_footer
      %s19 = sadd.s32 1, %s15
    $region7: #{tpu_custom_call.1} parent=1 // loop_footer_branch
      %14 = sbr.rel target = $region3
    $region8: #{tpu_custom_call.1} parent=1 // loop_exit
      _
    %600 = vsyncpa [#allocation6], 1
    %s601 = scalar_lea.sflag [#allocation6], 1
    %602 = vsyncpa %s601, 1
    %603 = vsyncpa [#allocation7], 1
    %s604 = scalar_lea.sflag [#allocation7], 1
    %605 = vsyncpa %s604, 1

</llo_original>
